<compile_context>
chip_gen: v5e
topology: v5e:2x2
jax: 0.10.0
libtpu: 0.0.40
codegen_flags: <defaults>
</compile_context>

<pallas_src>
import jax
import jax.numpy as jnp
from jax.experimental import pallas as pl
from jax.experimental.pallas import tpu as pltpu

_LANE = 128


def _round_up(x, m):
    return ((x + m - 1) // m) * m


def _concat_rows_kernel(*refs):
    """Load every modality row-tile and emit ONE lane-dense, full-width store."""
    *in_refs, out_ref = refs
    out_ref[...] = jnp.concatenate([r[...] for r in in_refs], axis=-1)


def _vmem_caps():
    """Return (tile_budget_bytes, vmem_limit_bytes), generation-aware."""
    physical = 128 * 1024 * 1024
    try:
        physical = int(pltpu.get_tpu_info().vmem_capacity_bytes)
    except Exception:
        pass  # conservative default: assume 128 MiB (v5e/v6e)
    if physical <= 64 * 1024 * 1024:
        # v7x: 64 MiB per TensorCore -- keep double-buffered tiles well under it.
        return 40 * 1024 * 1024, 48 * 1024 * 1024
    # v5e / v6e: 128 MiB physical (scoped default is only 16/32 MiB -> raise).
    return 56 * 1024 * 1024, 64 * 1024 * 1024


def concat_early(modalities, *, row_tile=None):
    """Pallas equivalent of ConcatEarly().forward(modalities) for 3-D inputs."""
    modalities = list(modalities)
    assert len(modalities) >= 1
    B, S = modalities[0].shape[0], modalities[0].shape[1]
    dtype = modalities[0].dtype
    for m in modalities:
        assert m.ndim == 3 and m.shape[0] == B and m.shape[1] == S
        assert m.dtype == dtype

    sizes = tuple(int(m.shape[2]) for m in modalities)
    d_out = int(sum(sizes))
    itemsize = jnp.dtype(dtype).itemsize
    pack = max(8, 32 // itemsize)  # sublane pack: 8 f32 / 16 bf16 / 32 int8

    # Flatten batch x seq into one row axis (free reshape on contiguous data).
    R = B * S
    flat = [m.reshape(R, d) for m, d in zip(modalities, sizes)]

    # Row tile from the corrected VMEM budget (lane padding + double buffering).
    tile_budget, vmem_limit = _vmem_caps()
    padded_lanes = sum(_round_up(d, _LANE) for d in sizes) + _round_up(d_out, _LANE)
    bytes_per_row = 2 * itemsize * padded_lanes
    tr_max = max(pack, tile_budget // bytes_per_row)

    tr = min(R, int(row_tile) if row_tile is not None else int(tr_max))
    if tr < R:
        # (8,128) rule: sublane block dim must be a pack multiple unless it
        # equals the full array extent.
        tr = max(pack, (tr // pack) * pack)

    # Megacore (v7x): ensure >= 2 grid steps so both TensorCores get a tile.
    if pl.cdiv(R, tr) < 2 and R > pack:
        tr = min(tr, _round_up(pl.cdiv(R, 2), pack))

    n_rows = pl.cdiv(R, tr)

    in_specs = [pl.BlockSpec((tr, d), lambda r: (r, 0)) for d in sizes]
    out_spec = pl.BlockSpec((tr, d_out), lambda r: (r, 0))

    out_flat = pl.pallas_call(
        _concat_rows_kernel,
        out_shape=jax.ShapeDtypeStruct((R, d_out), dtype),
        grid=(n_rows,),
        in_specs=in_specs,
        out_specs=out_spec,
        compiler_params=pltpu.CompilerParams(
            dimension_semantics=("parallel",),
            vmem_limit_bytes=int(vmem_limit),
        ),
    )(*flat)
    return out_flat.reshape(B, S, d_out)


if __name__ == "__main__":
    key = jax.random.PRNGKey(0)
    k1, k2, k3 = jax.random.split(key, 3)

    # Small shapes consistent with the module: batch=2, seq=8, hidden 32/16/48.
    x1 = jax.random.normal(k1, (2, 8, 32), dtype=jnp.float32)
    x2 = jax.random.normal(k2, (2, 8, 16), dtype=jnp.float32)
    x3 = jax.random.normal(k3, (2, 8, 48), dtype=jnp.float32)

    out = jax.block_until_ready(concat_early([x1, x2, x3]))
    ref = jnp.concatenate([x1, x2, x3], axis=2)
    assert out.shape == (2, 8, 96), out.shape
    assert out.dtype == jnp.float32
    assert jnp.array_equal(out, ref), "mismatch vs jnp.concatenate reference"

    # Second check: lane-aligned dims + explicit row tiling to exercise the
    # 1-D row grid with multiple pipelined steps (and a partial-tile-free split).
    k4, k5 = jax.random.split(k3)
    y1 = jax.random.normal(k4, (2, 64, 128), dtype=jnp.float32)
    y2 = jax.random.normal(k5, (2, 64, 256), dtype=jnp.float32)
    out2 = jax.block_until_ready(concat_early([y1, y2], row_tile=32))
    ref2 = jnp.concatenate([y1, y2], axis=2)
    assert out2.shape == (2, 64, 384), out2.shape
    assert jnp.array_equal(out2, ref2), "mismatch on tiled path"

    # Third check: non-divisible row count (partial last tile, masked store).
    k6, k7 = jax.random.split(k5)
    z1 = jax.random.normal(k6, (3, 10, 24), dtype=jnp.float32)
    z2 = jax.random.normal(k7, (3, 10, 40), dtype=jnp.float32)
    out3 = jax.block_until_ready(concat_early([z1, z2], row_tile=8))
    ref3 = jnp.concatenate([z1, z2], axis=2)
    assert out3.shape == (3, 10, 64), out3.shape
    assert jnp.array_equal(out3, ref3), "mismatch on partial-tile path"

    print("KERNEL_OK")
</pallas_src>

<mosaic_0001>
module attributes {stable_mosaic.version = 11 : i64} {
  func.func @_concat_rows_kernel(%arg0: i32, %arg1: memref<8x32xf32, #tpu.memory_space<vmem>>, %arg2: memref<8x16xf32, #tpu.memory_space<vmem>>, %arg3: memref<8x48xf32, #tpu.memory_space<vmem>>, %arg4: memref<8x96xf32, #tpu.memory_space<vmem>>) attributes {dimension_semantics = [#tpu.dimension_semantics<parallel>], iteration_bounds = array<i64: 2>, scalar_prefetch = 0 : i64, scratch_operands = 0 : i64, tpu.core_type = #tpu.core_type<tc>, window_params = [{transform_indices = @transform_0, window_bounds = array<i64: 8, 32>}, {transform_indices = @transform_1, window_bounds = array<i64: 8, 16>}, {transform_indices = @transform_2, window_bounds = array<i64: 8, 48>}, {transform_indices = @transform_3, window_bounds = array<i64: 8, 96>}]} {
    %c0 = arith.constant 0 : index
    %c0_0 = arith.constant 0 : index
    %0 = vector.load %arg1[%c0, %c0_0] : memref<8x32xf32, #tpu.memory_space<vmem>>, vector<8x32xf32>
    %c0_1 = arith.constant 0 : index
    %c0_2 = arith.constant 0 : index
    %1 = vector.load %arg2[%c0_1, %c0_2] : memref<8x16xf32, #tpu.memory_space<vmem>>, vector<8x16xf32>
    %c0_3 = arith.constant 0 : index
    %c0_4 = arith.constant 0 : index
    %2 = vector.load %arg3[%c0_3, %c0_4] : memref<8x48xf32, #tpu.memory_space<vmem>>, vector<8x48xf32>
    %3 = tpu.concatenate %0, %1, %2 in 1 : vector<8x32xf32>, vector<8x16xf32>, vector<8x48xf32> -> vector<8x96xf32>
    %c0_5 = arith.constant 0 : index
    %c0_6 = arith.constant 0 : index
    %4 = vector.load %arg4[%c0_5, %c0_6] : memref<8x96xf32, #tpu.memory_space<vmem>>, vector<8x96xf32>
    tpu.vector_store %arg4[%c0_5, %c0_6], %3 {strides = array<i32>} : memref<8x96xf32, #tpu.memory_space<vmem>>, vector<8x96xf32>,
    return
  }
  func.func @transform_0(%arg0: i32) -> (i32, i32) {
    %c0_i32 = arith.constant 0 : i32
    %c0_i32_0 = arith.constant 0 : i32
    return %arg0, %c0_i32 : i32, i32
  }
  func.func @transform_1(%arg0: i32) -> (i32, i32) {
    %c0_i32 = arith.constant 0 : i32
    %c0_i32_0 = arith.constant 0 : i32
    return %arg0, %c0_i32 : i32, i32
  }
  func.func @transform_2(%arg0: i32) -> (i32, i32) {
    %c0_i32 = arith.constant 0 : i32
    %c0_i32_0 = arith.constant 0 : i32
    return %arg0, %c0_i32 : i32, i32
  }
  func.func @transform_3(%arg0: i32) -> (i32, i32) {
    %c0_i32 = arith.constant 0 : i32
    %c0_i32_0 = arith.constant 0 : i32
    return %arg0, %c0_i32 : i32, i32
  }
}

</mosaic_0001>

<llo_original>
// kernel: tpu_custom_call.1
$region0: #{tpu_custom_call.1}
  #allocation0 [shape = 'u32[]', space=smem, size = 0x4, offset = 0x4, fixed_abs, tag = 'smem constant byte address 0x4 - core index']
  #allocation1 [shape = 'u32[72,128]{1,0:T(1,128)}', space=vmem, size = 0x9000, scoped, tag = 'internal scratch']
  %s0 = inlined_call_operand.hbm [shape: f32[16,32], index: 0, kind: input, shape index: {}]
  %s1 = inlined_call_operand.hbm [shape: f32[16,16], index: 1, kind: input, shape index: {}]
  %s2 = inlined_call_operand.hbm [shape: f32[16,48], index: 2, kind: input, shape index: {}]
  %s3 = inlined_call_operand.hbm [shape: f32[16,96], index: 3, kind: output, shape index: {}]
  %s4 = sld [smem:[#allocation0]]
  $region57: #{tpu_custom_call.1} parent=0
    _
  %s6 = ssub.s32 1, %s4
  %s7 = scalar_select 0, %s6, %s4
  $region1: #{tpu_custom_call.1} parent=0
    #allocation2 [shape = 'u8[8192]{0}', space=vmem, size = 0x2000, scoped, tag = 'input window, operand 0']
    #allocation3 [shape = 's32[2]{0}', space=sflag, size = 0x8, scoped, tag = 'scoped memory for tpu_custom_call.1']
    #allocation4 [shape = 's32[2]{0}', space=sflag, size = 0x8, scoped, tag = 'scoped memory for tpu_custom_call.1']
    #allocation5 [shape = 'u8[8192]{0}', space=vmem, size = 0x2000, scoped, tag = 'input window, operand 1']
    #allocation6 [shape = 's32[2]{0}', space=sflag, size = 0x8, scoped, tag = 'scoped memory for tpu_custom_call.1']
    #allocation7 [shape = 'u8[8192]{0}', space=vmem, size = 0x2000, scoped, tag = 'input window, operand 2']
    #allocation8 [shape = 'u8[8192]{0}', space=vmem, size = 0x2000, scoped, tag = 'output window, operand 0']
    %8 = vsyncpa [#allocation3], 0
    %s9 = scalar_lea.sflag [#allocation3], 1
    %10 = vsyncpa %s9, 0
    %11 = vsyncpa [#allocation6], 0
    %s12 = scalar_lea.sflag [#allocation6], 1
    %13 = vsyncpa %s12, 0
    %14 = vsyncpa [#allocation4], 0
    %s15 = scalar_lea.sflag [#allocation4], 1
    %16 = vsyncpa %s15, 0
    loop: start=0, step=1, limit=4
    $region2: #{tpu_custom_call.1} parent=1 // loop_pre_header
      _
    $region3: #{tpu_custom_call.1} parent=1 // loop_header
      %s18 = sphi 0, %s22
      %p19 = scmp.ge.s32.totalorder %s18, 4
      %s28 = sphi 0, %s30
      %s31 = sphi 0, %s28
      %s32 = sphi 0, %s31
      %s48 = sphi 0, %s32
      %s54 = sphi 0, %s56
      %s57 = sphi 0, %s54
      %s58 = sphi 0, %s57
      %s74 = sphi 0, %s58
      %s80 = sphi 0, %s82
      %s83 = sphi 0, %s80
      %s84 = sphi 0, %s83
      %s100 = sphi 0, %s84
      %s106 = sphi 0, %s108
      %s109 = sphi 0, %s106
      %s110 = sphi 0, %s109
      %s126 = sphi 0, %s110
    $region4: #{tpu_custom_call.1} parent=1 // loop_header_branch
      %21 = sbr.rel (%p19) target = $region8
    $region5: #{tpu_custom_call.1} parent=1 // loop_body
      %s23 = ssub.s32 %s18, 1
      %s24 = ssub.s32 %s18, 2
      %s25 = sadd.s32 %s18, 1
      %s26 = ssub.s32 %s18, %s25
      %p27 = scmp.eq.s32.totalorder %s26, 0
      %s29 = sadd.s32 %s28, 1
      %s30 = scalar_select %p27, %s28, %s29
      %p33 = pneg %p27
      %p34 = scmp.eq.s32.totalorder %s18, 1
      %p35 = por %p33, %p34
      %p36 = scmp.ne.s32.totalorder %s28, %s31
      %p37 = scmp.eq.s32.totalorder %s18, 0
      %p38 = por %p36, %p37
      %p39 = scmp.ne.s32.totalorder %s28, %s31
      %p40 = scmp.eq.s32.totalorder %s23, 1
      %p41 = por %p39, %p40
      %p42 = scmp.ne.s32.totalorder %s31, %s32
      %p43 = scmp.eq.s32.totalorder %s23, 0
      %p44 = por %p42, %p43
      %p45 = scmp.ne.s32.totalorder %s31, %s32
      %p46 = scmp.eq.s32.totalorder %s24, 1
      %p47 = por %p45, %p46
      %p49 = scmp.ne.s32.totalorder %s32, %s48
      %p50 = scmp.eq.s32.totalorder %s24, 0
      %p51 = por %p49, %p50
      %s52 = ssub.s32 %s18, %s25
      %p53 = scmp.eq.s32.totalorder %s52, 0
      %s55 = sadd.s32 %s54, 1
      %s56 = scalar_select %p53, %s54, %s55
      %p59 = pneg %p53
      %p60 = scmp.eq.s32.totalorder %s18, 1
      %p61 = por %p59, %p60
      %p62 = scmp.ne.s32.totalorder %s54, %s57
      %p63 = scmp.eq.s32.totalorder %s18, 0
      %p64 = por %p62, %p63
      %p65 = scmp.ne.s32.totalorder %s54, %s57
      %p66 = scmp.eq.s32.totalorder %s23, 1
      %p67 = por %p65, %p66
      %p68 = scmp.ne.s32.totalorder %s57, %s58
      %p69 = scmp.eq.s32.totalorder %s23, 0
      %p70 = por %p68, %p69
      %p71 = scmp.ne.s32.totalorder %s57, %s58
      %p72 = scmp.eq.s32.totalorder %s24, 1
      %p73 = por %p71, %p72
      %p75 = scmp.ne.s32.totalorder %s58, %s74
      %p76 = scmp.eq.s32.totalorder %s24, 0
      %p77 = por %p75, %p76
      %s78 = ssub.s32 %s18, %s25
      %p79 = scmp.eq.s32.totalorder %s78, 0
      %s81 = sadd.s32 %s80, 1
      %s82 = scalar_select %p79, %s80, %s81
      %p85 = pneg %p79
      %p86 = scmp.eq.s32.totalorder %s18, 1
      %p87 = por %p85, %p86
      %p88 = scmp.ne.s32.totalorder %s80, %s83
      %p89 = scmp.eq.s32.totalorder %s18, 0
      %p90 = por %p88, %p89
      %p91 = scmp.ne.s32.totalorder %s80, %s83
      %p92 = scmp.eq.s32.totalorder %s23, 1
      %p93 = por %p91, %p92
      %p94 = scmp.ne.s32.totalorder %s83, %s84
      %p95 = scmp.eq.s32.totalorder %s23, 0
      %p96 = por %p94, %p95
      %p97 = scmp.ne.s32.totalorder %s83, %s84
      %p98 = scmp.eq.s32.totalorder %s24, 1
      %p99 = por %p97, %p98
      %p101 = scmp.ne.s32.totalorder %s84, %s100
      %p102 = scmp.eq.s32.totalorder %s24, 0
      %p103 = por %p101, %p102
      %s104 = ssub.s32 %s18, %s25
      %p105 = scmp.eq.s32.totalorder %s104, 0
      %s107 = sadd.s32 %s106, 1
      %s108 = scalar_select %p105, %s106, %s107
      %p111 = pneg %p105
      %p112 = scmp.eq.s32.totalorder %s18, 1
      %p113 = por %p111, %p112
      %p114 = scmp.ne.s32.totalorder %s106, %s109
      %p115 = scmp.eq.s32.totalorder %s18, 0
      %p116 = por %p114, %p115
      %p117 = scmp.ne.s32.totalorder %s106, %s109
      %p118 = scmp.eq.s32.totalorder %s23, 1
      %p119 = por %p117, %p118
      %p120 = scmp.ne.s32.totalorder %s109, %s110
      %p121 = scmp.eq.s32.totalorder %s23, 0
      %p122 = por %p120, %p121
      %p123 = scmp.ne.s32.totalorder %s109, %s110
      %p124 = scmp.eq.s32.totalorder %s24, 1
      %p125 = por %p123, %p124
      %p127 = scmp.ne.s32.totalorder %s110, %s126
      %p128 = scmp.eq.s32.totalorder %s24, 0
      %p129 = por %p127, %p128
      %p130 = scmp.le.s32.totalorder 1, %s18
      %p131 = scmp.lt.s32.totalorder %s18, 3
      %p132 = pnand %p130, %p131
      %p133 = pneg %p132
      // Predicated region
      $region9: #{tpu_custom_call.1} parent=5 // pred_check
        _
      $region10: #{tpu_custom_call.1} parent=5 // pred_check_branch
        %135 = sbr.rel (%p132) target = $region12
      $region11: #{tpu_custom_call.1} parent=5 // pred_region
        %s136 = ssub.s32 %s18, 1
      $region12: #{tpu_custom_call.1} parent=5 // pred_fallthru
        _
      %p137 = scmp.lt.s32.totalorder %s18, 2
      // Predicated region
      $region13: #{tpu_custom_call.1} parent=5 // pred_check
        %p138 = pneg %p137
      $region14: #{tpu_custom_call.1} parent=5 // pred_check_branch
        %140 = sbr.rel (%p138) target = $region16
      $region15: #{tpu_custom_call.1} parent=5 // pred_region
        // Predicated region
        $region17: #{tpu_custom_call.1} parent=15 // pred_check
          %p141 = pneg %p38
        $region18: #{tpu_custom_call.1} parent=15 // pred_check_branch
          %143 = sbr.rel (%p141) target = $region20
        $region19: #{tpu_custom_call.1} parent=15 // pred_region
          %s144 = sand.u32 %s28, 1
          %s145 = scalar_lea.sflag [#allocation3], %s144
          %s146 = sand.u32 %s28, 1
          %s147 = smul.addr %s146, 8
          %s148 = scalar_lea.vmem [#allocation2], %s147
          %150 = vsyncadd %s145, 0
          %s151 = smul.addr %s18, 8
          %s152 = scalar_lea.hbm %s0, %s151
          %s154 = sshll.u32 %s152, 4
          %s155 = int_to_ptr.hbm [resolvable:$true] %s154
          %s156 = sshll.u32 %s148, 4
          %s157 = int_to_ptr.vmem [resolvable:$true] %s156
          %159 = dma.hbm_to_vmem [thread:$0]  %s155, 128, %s157, %s145
        $region20: #{tpu_custom_call.1} parent=15 // pred_fallthru
          _
        // Predicated region
        $region21: #{tpu_custom_call.1} parent=15 // pred_check
          %p160 = pneg %p64
        $region22: #{tpu_custom_call.1} parent=15 // pred_check_branch
          %162 = sbr.rel (%p160) target = $region24
        $region23: #{tpu_custom_call.1} parent=15 // pred_region
          %s163 = sand.u32 %s18, 1
          %s164 = scalar_lea.sflag [#allocation6], %s163
          %s165 = sand.u32 %s54, 1
          %s166 = smul.addr %s165, 8
          %s167 = scalar_lea.vmem [#allocation5], %s166
          %169 = vsyncadd %s164, 0
          %s170 = smul.addr %s18, 8
          %s171 = scalar_lea.hbm %s1, %s170
          %s173 = sshll.u32 %s171, 4
          %s174 = int_to_ptr.hbm [resolvable:$true] %s173
          %s175 = sshll.u32 %s167, 4
          %s176 = int_to_ptr.vmem [resolvable:$true] %s175
          %178 = dma.hbm_to_vmem [thread:$0]  %s174, 128, %s176, %s164
        $region24: #{tpu_custom_call.1} parent=15 // pred_fallthru
          _
        // Predicated region
        $region25: #{tpu_custom_call.1} parent=15 // pred_check
          %p179 = pneg %p90
        $region26: #{tpu_custom_call.1} parent=15 // pred_check_branch
          %181 = sbr.rel (%p179) target = $region28
        $region27: #{tpu_custom_call.1} parent=15 // pred_region
          %s182 = sand.u32 %s18, 1
          %s183 = scalar_lea.sflag [#allocation6], %s182
          %s184 = sand.u32 %s80, 1
          %s185 = smul.addr %s184, 8
          %s186 = scalar_lea.vmem [#allocation7], %s185
          %188 = vsyncadd %s183, 0
          %s189 = smul.addr %s18, 8
          %s190 = scalar_lea.hbm %s2, %s189
          %s192 = sshll.u32 %s190, 4
          %s193 = int_to_ptr.hbm [resolvable:$true] %s192
          %s194 = sshll.u32 %s186, 4
          %s195 = int_to_ptr.vmem [resolvable:$true] %s194
          %197 = dma.hbm_to_vmem [thread:$0]  %s193, 128, %s195, %s183
        $region28: #{tpu_custom_call.1} parent=15 // pred_fallthru
          _
      $region16: #{tpu_custom_call.1} parent=5 // pred_fallthru
        _
      %p198 = scmp.le.s32.totalorder 1, %s18
      %p199 = scmp.lt.s32.totalorder %s18, 3
      %p200 = pnand %p198, %p199
      %p201 = pneg %p200
      // Predicated region
      $region29: #{tpu_custom_call.1} parent=5 // pred_check
        _
      $region30: #{tpu_custom_call.1} parent=5 // pred_check_branch
        %203 = sbr.rel (%p200) target = $region32
      $region31: #{tpu_custom_call.1} parent=5 // pred_region
        %s204 = ssub.s32 %s18, 1
        %s205 = sand.u32 %s31, 1
        %s206 = scalar_lea.sflag [#allocation3], %s205
        %s207 = sand.u32 %s31, 1
        %s208 = smul.addr %s207, 8
        %s209 = scalar_lea.vmem [#allocation2], %s208
        // Predicated region
        $region33: #{tpu_custom_call.1} parent=31 // pred_check
          %p210 = pneg %p44
        $region34: #{tpu_custom_call.1} parent=31 // pred_check_branch
          %212 = sbr.rel (%p210) target = $region36
        $region35: #{tpu_custom_call.1} parent=31 // pred_region
          %214 = dma.done %s206, 128
        $region36: #{tpu_custom_call.1} parent=31 // pred_fallthru
          _
        %s215 = sand.u32 %s23, 1
        %s216 = scalar_lea.sflag [#allocation6], %s215
        %s217 = sand.u32 %s57, 1
        %s218 = smul.addr %s217, 8
        %s219 = scalar_lea.vmem [#allocation5], %s218
        // Predicated region
        $region37: #{tpu_custom_call.1} parent=31 // pred_check
          %p220 = pneg %p70
        $region38: #{tpu_custom_call.1} parent=31 // pred_check_branch
          %222 = sbr.rel (%p220) target = $region40
        $region39: #{tpu_custom_call.1} parent=31 // pred_region
          %224 = dma.done %s216, 128
        $region40: #{tpu_custom_call.1} parent=31 // pred_fallthru
          _
        %s225 = sand.u32 %s23, 1
        %s226 = scalar_lea.sflag [#allocation6], %s225
        %s227 = sand.u32 %s83, 1
        %s228 = smul.addr %s227, 8
        %s229 = scalar_lea.vmem [#allocation7], %s228
        // Predicated region
        $region41: #{tpu_custom_call.1} parent=31 // pred_check
          %p230 = pneg %p96
        $region42: #{tpu_custom_call.1} parent=31 // pred_check_branch
          %232 = sbr.rel (%p230) target = $region44
        $region43: #{tpu_custom_call.1} parent=31 // pred_region
          %234 = dma.done %s226, 128
        $region44: #{tpu_custom_call.1} parent=31 // pred_fallthru
          _
        %s235 = sand.u32 %s31, 1
        %s236 = scalar_lea.sflag [#allocation3], %s235
        %s237 = sand.u32 %s31, 1
        %s238 = smul.addr %s237, 8
        %s239 = scalar_lea.vmem [#allocation2], %s238
        %p240 = pneg %p44
        %p241 = pneg %p41
        %s242 = sand.u32 %s23, 1
        %s243 = scalar_lea.sflag [#allocation6], %s242
        %s244 = sand.u32 %s57, 1
        %s245 = smul.addr %s244, 8
        %s246 = scalar_lea.vmem [#allocation5], %s245
        %p247 = pneg %p70
        %p248 = pneg %p67
        %s249 = sand.u32 %s23, 1
        %s250 = scalar_lea.sflag [#allocation6], %s249
        %s251 = sand.u32 %s83, 1
        %s252 = smul.addr %s251, 8
        %s253 = scalar_lea.vmem [#allocation7], %s252
        %p254 = pneg %p96
        %p255 = pneg %p93
        %p256 = pneg %p122
        %p257 = pneg %p119
        %s258 = sand.u32 %s109, 1
        %s259 = scalar_lea.sflag [#allocation4], %s258
        %s260 = sand.u32 %s109, 1
        %s261 = smul.addr %s260, 8
        %s262 = scalar_lea.vmem [#allocation8], %s261
        %v263 = vld [vmem:[%s209] sm:$0xff]
        %v264 = vld [vmem:[%s219] sm:$0xff]
        %v265 = vld [vmem:[%s229] sm:$0xff]
        %267 = vrot.lane.b32.xlu0 %v264, 32
        %v268 = vpop.permute.xlu0 %267
        %271 = vrot.lane.b32.xlu0 %v265, 48
        %v272 = vpop.permute.xlu0 %271
        %vm274 = vcmask 261120
        %v275 = vsel %vm274, %v263, %v268
        %vm276 = vcmask 392192
        %v277 = vsel %vm276, %v275, %v272
        %vm278 = vcmask 785408
        %279 = vst.msk [vmem:[%s262] sm:$0xff] %vm278, %v277
        %s280 = sand.u32 %s109, 1
        %s281 = scalar_lea.sflag [#allocation4], %s280
        %s282 = sand.u32 %s109, 1
        %s283 = smul.addr %s282, 8
        %s284 = scalar_lea.vmem [#allocation8], %s283
        // Predicated region
        $region45: #{tpu_custom_call.1} parent=31 // pred_check
          %p285 = pneg %p119
        $region46: #{tpu_custom_call.1} parent=31 // pred_check_branch
          %287 = sbr.rel (%p285) target = $region48
        $region47: #{tpu_custom_call.1} parent=31 // pred_region
          %289 = vsyncadd %s281, 0
          %s290 = smul.addr %s23, 8
          %s291 = scalar_lea.hbm %s3, %s290
          %s293 = sshll.u32 %s284, 4
          %s294 = int_to_ptr.vmem [resolvable:$true] %s293
          %s295 = sshll.u32 %s291, 4
          %s296 = int_to_ptr.hbm [resolvable:$true] %s295
          %298 = dma.vmem_to_hbm [thread:$0]  %s294, 128, %s296, %s281
        $region48: #{tpu_custom_call.1} parent=31 // pred_fallthru
          _
      $region32: #{tpu_custom_call.1} parent=5 // pred_fallthru
        _
      %p299 = scmp.le.s32.totalorder 2, %s18
      // Predicated region
      $region49: #{tpu_custom_call.1} parent=5 // pred_check
        %p300 = pneg %p299
      $region50: #{tpu_custom_call.1} parent=5 // pred_check_branch
        %302 = sbr.rel (%p300) target = $region52
      $region51: #{tpu_custom_call.1} parent=5 // pred_region
        %s303 = ssub.s32 %s18, 2
        // Predicated region
        $region53: #{tpu_custom_call.1} parent=51 // pred_check
          %p304 = pneg %p125
        $region54: #{tpu_custom_call.1} parent=51 // pred_check_branch
          %306 = sbr.rel (%p304) target = $region56
        $region55: #{tpu_custom_call.1} parent=51 // pred_region
          %s307 = sand.u32 %s110, 1
          %s308 = scalar_lea.sflag [#allocation4], %s307
          %s309 = sand.u32 %s110, 1
          %s310 = smul.addr %s309, 8
          %s311 = scalar_lea.vmem [#allocation8], %s310
          %313 = dma.done %s308, 128
        $region56: #{tpu_custom_call.1} parent=51 // pred_fallthru
          _
      $region52: #{tpu_custom_call.1} parent=5 // pred_fallthru
        _
    $region6: #{tpu_custom_call.1} parent=1 // loop_footer
      %s22 = sadd.s32 1, %s18
    $region7: #{tpu_custom_call.1} parent=1 // loop_footer_branch
      %17 = sbr.rel target = $region3
    $region8: #{tpu_custom_call.1} parent=1 // loop_exit
      _
    %314 = vsyncpa [#allocation3], 1
    %s315 = scalar_lea.sflag [#allocation3], 1
    %316 = vsyncpa %s315, 1
    %317 = vsyncpa [#allocation6], 1
    %s318 = scalar_lea.sflag [#allocation6], 1
    %319 = vsyncpa %s318, 1
    %320 = vsyncpa [#allocation4], 1
    %s321 = scalar_lea.sflag [#allocation4], 1
    %322 = vsyncpa %s321, 1

</llo_original>
